<compile_context>
chip_gen: v5e
topology: v5e:2x2
jax: 0.10.0
libtpu: 0.0.40
codegen_flags: <defaults>
</compile_context>

<pallas_src>
import jax
import jax.numpy as jnp
from jax import lax
from jax.experimental import pallas as pl
from jax.experimental.pallas import tpu as pltpu


def _round_up(x, m):
    return (x + m - 1) // m * m


def _pick_tile(dim, pref, align):
    """Tile size and padded extent for one dimension."""
    if dim >= pref:
        return pref, _round_up(dim, pref)
    p = _round_up(dim, align)
    return p, p


def _pad2(x, shape):
    pr, pc = shape[0] - x.shape[0], shape[1] - x.shape[1]
    if pr == 0 and pc == 0:
        return x
    return jnp.pad(x, ((0, pr), (0, pc)))


# ---------------------------------------------------------------------------
# Fused scaled matmul kernel (MXU, bf16 in / f32 accumulate):
#   out = rscale * ((A * kscale) @ B) * cscale
#   optionally: out = phi * P + (1 - phi) * out      (fused blend epilogue)
# trans_a / trans_b read A as (K, M) / B as (N, K) directly (no HBM transpose).
# ---------------------------------------------------------------------------
def _make_mm_kernel(trans_a, trans_b, has_blend, phi):
    lhs_c = (0,) if trans_a else (1,)
    rhs_c = (1,) if trans_b else (0,)
    dims = ((lhs_c, rhs_c), ((), ()))

    def kernel(a_ref, b_ref, ks_ref, rs_ref, cs_ref, *refs):
        if has_blend:
            p_ref, o_ref, acc_ref = refs
        else:
            o_ref, acc_ref = refs

        @pl.when(pl.program_id(2) == 0)
        def _():
            acc_ref[...] = jnp.zeros_like(acc_ref)

        a = a_ref[...] * ks_ref[...]                       # bf16 * bf16 -> bf16
        acc_ref[...] += lax.dot_general(
            a, b_ref[...], dims, preferred_element_type=jnp.float32)

        @pl.when(pl.program_id(2) == pl.num_programs(2) - 1)
        def _():
            res = acc_ref[...] * rs_ref[...] * cs_ref[...]
            if has_blend:
                res = phi * p_ref[...] + (1.0 - phi) * res
            o_ref[...] = res.astype(o_ref.dtype)

    return kernel


def scaled_matmul(a, b, *, trans_a=False, trans_b=False, k_scale=None,
                  r_scale=None, c_scale=None, blend=None):
    """out = diag(r_scale) @ ((A * k_scale_along_K) @ B) @ diag(c_scale).

    blend=(P, phi) additionally returns phi*P + (1-phi)*out (fused epilogue).
    """
    if trans_a:
        K, M = a.shape
    else:
        M, K = a.shape
    if trans_b:
        N, Kb = b.shape
    else:
        Kb, N = b.shape
    assert K == Kb, (a.shape, b.shape, trans_a, trans_b)

    tm, Mp = _pick_tile(M, 256, 8)
    tn, Np = _pick_tile(N, 256, 128)         # lane-dense output (>=128)
    if K < 128:                              # unpadded small-K path (K=frequency)
        tk, Kp = K, K
    elif K < 512:
        tk = _round_up(K, 128)
        Kp = tk
    else:
        tk, Kp = 512, _round_up(K, 512)

    a_p = _pad2(a.astype(jnp.bfloat16), (Kp, Mp) if trans_a else (Mp, Kp))
    b_p = _pad2(b.astype(jnp.bfloat16), (Np, Kp) if trans_b else (Kp, Np))

    ks = jnp.ones((K,), jnp.float32) if k_scale is None else k_scale.astype(jnp.float32)
    rs = jnp.ones((M,), jnp.float32) if r_scale is None else r_scale.astype(jnp.float32)
    cs = jnp.ones((N,), jnp.float32) if c_scale is None else c_scale.astype(jnp.float32)

    if trans_a:   # A block is (tk, tm) -> broadcast k-scale along columns
        ks_p = _pad2(ks.astype(jnp.bfloat16).reshape(K, 1), (Kp, 1))
        ks_spec = pl.BlockSpec((tk, 1), lambda i, j, k: (k, 0))
    else:         # A block is (tm, tk) -> broadcast k-scale along rows
        ks_p = _pad2(ks.astype(jnp.bfloat16).reshape(1, K), (1, Kp))
        ks_spec = pl.BlockSpec((1, tk), lambda i, j, k: (0, k))
    rs_p = _pad2(rs.reshape(M, 1), (Mp, 1))
    cs_p = _pad2(cs.reshape(1, N), (1, Np))

    a_spec = (pl.BlockSpec((tk, tm), lambda i, j, k: (k, i)) if trans_a
              else pl.BlockSpec((tm, tk), lambda i, j, k: (i, k)))
    b_spec = (pl.BlockSpec((tn, tk), lambda i, j, k: (j, k)) if trans_b
              else pl.BlockSpec((tk, tn), lambda i, j, k: (k, j)))

    in_specs = [a_spec, b_spec, ks_spec,
                pl.BlockSpec((tm, 1), lambda i, j, k: (i, 0)),
                pl.BlockSpec((1, tn), lambda i, j, k: (0, j))]
    args = [a_p, b_p, ks_p, rs_p, cs_p]

    phi = 0.0
    if blend is not None:
        other, phi = blend
        in_specs.append(pl.BlockSpec((tm, tn), lambda i, j, k: (i, j)))
        args.append(_pad2(other.astype(jnp.float32), (Mp, Np)))

    kernel = _make_mm_kernel(trans_a, trans_b, blend is not None, float(phi))

    out = pl.pallas_call(
        kernel,
        out_shape=jax.ShapeDtypeStruct((Mp, Np), jnp.float32),
        grid_spec=pltpu.PrefetchScalarGridSpec(
            num_scalar_prefetch=0,
            grid=(Mp // tm, Np // tn, Kp // tk),
            in_specs=in_specs,
            out_specs=pl.BlockSpec((tm, tn), lambda i, j, k: (i, j)),
            scratch_shapes=[pltpu.VMEM((tm, tn), jnp.float32)],
        ),
        compiler_params=pltpu.CompilerParams(
            dimension_semantics=("parallel", "parallel", "arbitrary")),
    )(*args)
    return out[:M, :N]


# ---------------------------------------------------------------------------
# Grid-tiled elementwise diag scaling:  out = diag(row) @ M @ diag(col)
# ---------------------------------------------------------------------------
def _scale_kernel(m_ref, r_ref, c_ref, o_ref):
    o_ref[...] = m_ref[...] * r_ref[...] * c_ref[...]


def pallas_scale(mat, row=None, col=None):
    mat = mat.astype(jnp.float32)
    M, N = mat.shape
    bm, Mp = _pick_tile(M, 256, 8)
    bn, Np = _pick_tile(N, 512, 128)         # lane-dense tiles
    r = jnp.ones((M,), jnp.float32) if row is None else row.astype(jnp.float32)
    c = jnp.ones((N,), jnp.float32) if col is None else col.astype(jnp.float32)
    out = pl.pallas_call(
        _scale_kernel,
        out_shape=jax.ShapeDtypeStruct((Mp, Np), jnp.float32),
        grid_spec=pltpu.PrefetchScalarGridSpec(
            num_scalar_prefetch=0,
            grid=(Mp // bm, Np // bn),
            in_specs=[pl.BlockSpec((bm, bn), lambda i, j: (i, j)),
                      pl.BlockSpec((bm, 1), lambda i, j: (i, 0)),
                      pl.BlockSpec((1, bn), lambda i, j: (0, j))],
            out_specs=pl.BlockSpec((bm, bn), lambda i, j: (i, j)),
        ),
        compiler_params=pltpu.CompilerParams(
            dimension_semantics=("parallel", "parallel")),
    )(_pad2(mat, (Mp, Np)), _pad2(r.reshape(M, 1), (Mp, 1)),
      _pad2(c.reshape(1, N), (1, Np)))
    return out[:M, :N]


def _safe_rsqrt(x):
    ok = x > 0
    return jnp.where(ok, lax.rsqrt(jnp.where(ok, x, 1.0)), 0.0)


# ---------------------------------------------------------------------------
# PGSP_Encoder.forward, densified.
# ---------------------------------------------------------------------------
def pgsp_encoder_forward(R, user_num, item_num, frequency, phi):
    R = R.astype(jnp.float32)

    rowsum = jnp.sum(R, axis=1)              # R.sum(axis=1)
    colsum = jnp.sum(R, axis=0)              # R.sum(axis=0)
    du_inv = _safe_rsqrt(rowsum)             # Du_
    di_inv = _safe_rsqrt(colsum)             # Di_
    di = jnp.sqrt(colsum)                    # Di

    # Cu = (R Di_)(R Di_)^T  == (R * di_inv^2 along K) @ R^T
    Cu = scaled_matmul(R, R, trans_b=True, k_scale=di_inv * di_inv)      # (u,u)
    # Ci = (Du_ R)^T (Du_ R) == R^T @ (R scaled by du_inv^2 along K)
    Ci = scaled_matmul(R, R, trans_a=True, k_scale=du_inv * du_inv)      # (i,i)
    # R_post = Du_ R Di_  =>  Cu0 = Du_ Cu Du_ ,  Ci0 = Di_ Ci Di_
    Cu0 = pallas_scale(Cu, row=du_inv, col=du_inv)                       # (u,u)
    Ci0 = pallas_scale(Ci, row=di_inv, col=di_inv)                       # (i,i)

    A = jnp.block([[Cu, R], [R.T, Ci]])                                  # (u+i, u+i)
    d_inv = _safe_rsqrt(jnp.sum(A, axis=0))                              # D_
    A_norm = pallas_scale(A, row=d_inv, col=d_inv)
    n = user_num + item_num
    L_norm = jnp.eye(n, dtype=jnp.float32) - A_norm

    # TODO(synk): scipy.sparse.linalg.eigsh (Lanczos, which='SA') + the
    # on-disk pickle eigen-cache have no Pallas equivalent; replaced with a
    # dense jnp.linalg.eigh and taking the `frequency` smallest eigenpairs.
    _val, eigvec = jnp.linalg.eigh(L_norm)
    vec = eigvec[:, :frequency]                                          # (u+i, f)

    R_b = jnp.concatenate([Cu0, R], axis=1)                              # (u, u+i)
    d_rb = jnp.sum(R_b, axis=0)
    d_rb_inv = _safe_rsqrt(d_rb)                                         # D_Rb_i_
    d_rb_sqrt = jnp.sqrt(d_rb)                                           # D_Rb_i

    # P0 = R * Di_ * Ci0 * Di  (scalings fused into the matmul)
    P0 = scaled_matmul(R, Ci0, k_scale=di_inv, c_scale=di)               # (u, i)

    # P1 = (R_b D_Rb_i_) @ vec @ (vec^T D_Rb_i), item columns only,
    # final matmul fused with the phi blend:  P = phi*P0 + (1-phi)*P1.
    P1a = scaled_matmul(R_b, vec, k_scale=d_rb_inv)                      # (u, f)
    vec_items = vec[user_num:, :]                                        # (i, f)
    P = scaled_matmul(P1a, vec_items, trans_b=True,
                      c_scale=d_rb_sqrt[user_num:],
                      blend=(P0, phi))                                   # (u, i)
    return P


if __name__ == "__main__":
    user_num, item_num = 32, 48
    n_layers, frequency, phi = 2, 8, 0.3

    # Deterministic synthetic interaction matrix (binary, every row/col nonzero).
    key = jax.random.PRNGKey(0)
    R = (jax.random.uniform(key, (user_num, item_num)) < 0.3).astype(jnp.float32)
    R = R.at[jnp.arange(user_num), jnp.arange(user_num) % item_num].set(1.0)
    R = R.at[jnp.arange(item_num) % user_num, jnp.arange(item_num)].set(1.0)

    # Sanity: fused scaled matmul (bf16 MXU, f32 acc, trans_b, k-scale) vs
    # a bf16-matched jnp reference on odd shapes.
    ka, kb, ks = jax.random.split(jax.random.PRNGKey(1), 3)
    a = jax.random.normal(ka, (40, 56), jnp.float32)
    b = jax.random.normal(kb, (24, 56), jnp.float32)       # given transposed
    s = jax.random.uniform(ks, (56,), jnp.float32) + 0.5
    a16, b16, s16 = (x.astype(jnp.bfloat16) for x in (a, b, s))
    ref = jnp.dot((a16 * s16[None, :]).astype(jnp.float32),
                  b16.astype(jnp.float32).T)
    got = scaled_matmul(a, b, trans_b=True, k_scale=s)
    assert bool(jnp.allclose(got, ref, rtol=1e-2, atol=1e-2)), "matmul mismatch"

    # Sanity: tiled diag scaling kernel.
    km, kr, kc = jax.random.split(jax.random.PRNGKey(2), 3)
    m = jax.random.normal(km, (20, 30), jnp.float32)
    rv = jax.random.uniform(kr, (20,), jnp.float32) + 0.5
    cv = jax.random.uniform(kc, (30,), jnp.float32) + 0.5
    ref_s = rv[:, None] * m * cv[None, :]
    assert bool(jnp.allclose(pallas_scale(m, row=rv, col=cv), ref_s,
                             rtol=1e-5, atol=1e-5)), "scale mismatch"

    P = pgsp_encoder_forward(R, user_num, item_num, frequency, phi)
    P = jax.block_until_ready(P)
    assert P.shape == (user_num, item_num), P.shape
    assert bool(jnp.all(jnp.isfinite(P))), "non-finite output"
    print("KERNEL_OK")
</pallas_src>

<mosaic_0001>
module attributes {stable_mosaic.version = 11 : i64} {
  func.func @kernel(%arg0: i32, %arg1: i32, %arg2: i32, %arg3: memref<40x56xbf16, #tpu.memory_space<vmem>>, %arg4: memref<128x56xbf16, #tpu.memory_space<vmem>>, %arg5: memref<1x56xbf16, #tpu.memory_space<vmem>>, %arg6: memref<40x1xf32, #tpu.memory_space<vmem>>, %arg7: memref<1x128xf32, #tpu.memory_space<vmem>>, %arg8: memref<40x128xf32, #tpu.memory_space<vmem>>, %arg9: memref<40x128xf32, #tpu.memory_space<vmem>>) attributes {dimension_semantics = [#tpu.dimension_semantics<parallel>, #tpu.dimension_semantics<parallel>, #tpu.dimension_semantics<arbitrary>], iteration_bounds = array<i64: 1, 1, 1>, scalar_prefetch = 0 : i64, scratch_operands = 1 : i64, tpu.core_type = #tpu.core_type<tc>, window_params = [{transform_indices = @transform_0, window_bounds = array<i64: 40, 56>}, {transform_indices = @transform_1, window_bounds = array<i64: 128, 56>}, {transform_indices = @transform_2, window_bounds = array<i64: 1, 56>}, {transform_indices = @transform_3, window_bounds = array<i64: 40, 1>}, {transform_indices = @transform_4, window_bounds = array<i64: 1, 128>}, {transform_indices = @transform_5, window_bounds = array<i64: 40, 128>}]} {
    %c0_i32 = arith.constant 0 : i32
    %0 = arith.cmpi eq, %arg2, %c0_i32 : i32
    %1 = arith.extui %0 : i1 to i32
    %c0_i32_0 = arith.constant 0 : i32
    %2 = arith.cmpi ne, %1, %c0_i32_0 : i32
    scf.if %2 {
      %cst_12 = arith.constant 0.000000e+00 : f32
      %15 = vector.broadcast %cst_12 : f32 to vector<40x128xf32>
      %c0_13 = arith.constant 0 : index
      %c0_14 = arith.constant 0 : index
      %16 = vector.load %arg9[%c0_13, %c0_14] : memref<40x128xf32, #tpu.memory_space<vmem>>, vector<40x128xf32>
      tpu.vector_store %arg9[%c0_13, %c0_14], %15 {strides = array<i32>} : memref<40x128xf32, #tpu.memory_space<vmem>>, vector<40x128xf32>,
    } else {
    }
    %c0 = arith.constant 0 : index
    %c0_1 = arith.constant 0 : index
    %3 = vector.load %arg3[%c0, %c0_1] : memref<40x56xbf16, #tpu.memory_space<vmem>>, vector<40x56xbf16>
    %c0_2 = arith.constant 0 : index
    %c0_3 = arith.constant 0 : index
    %4 = vector.load %arg5[%c0_2, %c0_3] : memref<1x56xbf16, #tpu.memory_space<vmem>>, vector<1x56xbf16>
    %5 = vector.broadcast %4 : vector<1x56xbf16> to vector<40x56xbf16>
    %6 = arith.mulf %3, %5 : vector<40x56xbf16>
    %c0_4 = arith.constant 0 : index
    %c0_5 = arith.constant 0 : index
    %7 = vector.load %arg9[%c0_4, %c0_5] : memref<40x128xf32, #tpu.memory_space<vmem>>, vector<40x128xf32>
    %c0_6 = arith.constant 0 : index
    %c0_7 = arith.constant 0 : index
    %8 = vector.load %arg4[%c0_6, %c0_7] : memref<128x56xbf16, #tpu.memory_space<vmem>>, vector<128x56xbf16>
    %cst = arith.constant dense<0.000000e+00> : vector<40x128xf32>
    %9 = tpu.matmul %6, %8, %cst {dimension_numbers = #tpu.dot_dimension_numbers<[1], [1], [0], [0], [0, 0, 1, 0], [], []>} : vector<40x56xbf16>, vector<128x56xbf16>, vector<40x128xf32> -> vector<40x128xf32>
    %10 = arith.addf %7, %9 : vector<40x128xf32>
    %c0_8 = arith.constant 0 : index
    %c0_9 = arith.constant 0 : index
    %11 = vector.load %arg9[%c0_8, %c0_9] : memref<40x128xf32, #tpu.memory_space<vmem>>, vector<40x128xf32>
    tpu.vector_store %arg9[%c0_8, %c0_9], %10 {strides = array<i32>} : memref<40x128xf32, #tpu.memory_space<vmem>>, vector<40x128xf32>,
    %c0_i32_10 = arith.constant 0 : i32
    %12 = arith.cmpi eq, %arg2, %c0_i32_10 : i32
    %13 = arith.extui %12 : i1 to i32
    %c0_i32_11 = arith.constant 0 : i32
    %14 = arith.cmpi ne, %13, %c0_i32_11 : i32
    scf.if %14 {
      %c0_12 = arith.constant 0 : index
      %c0_13 = arith.constant 0 : index
      %15 = vector.load %arg9[%c0_12, %c0_13] : memref<40x128xf32, #tpu.memory_space<vmem>>, vector<40x128xf32>
      %c0_14 = arith.constant 0 : index
      %c0_15 = arith.constant 0 : index
      %16 = vector.load %arg6[%c0_14, %c0_15] : memref<40x1xf32, #tpu.memory_space<vmem>>, vector<40x1xf32>
      %17 = vector.broadcast %16 : vector<40x1xf32> to vector<40x128xf32>
      %18 = arith.mulf %15, %17 : vector<40x128xf32>
      %c0_16 = arith.constant 0 : index
      %c0_17 = arith.constant 0 : index
      %19 = vector.load %arg7[%c0_16, %c0_17] : memref<1x128xf32, #tpu.memory_space<vmem>>, vector<1x128xf32>
      %20 = vector.broadcast %19 : vector<1x128xf32> to vector<40x128xf32>
      %21 = arith.mulf %18, %20 : vector<40x128xf32>
      %c0_18 = arith.constant 0 : index
      %c0_19 = arith.constant 0 : index
      %22 = vector.load %arg8[%c0_18, %c0_19] : memref<40x128xf32, #tpu.memory_space<vmem>>, vector<40x128xf32>
      tpu.vector_store %arg8[%c0_18, %c0_19], %21 {strides = array<i32>} : memref<40x128xf32, #tpu.memory_space<vmem>>, vector<40x128xf32>,
    } else {
    }
    return
  }
  func.func @transform_0(%arg0: i32, %arg1: i32, %arg2: i32) -> (i32, i32) {
    %c0_i32 = arith.constant 0 : i32
    return %arg0, %arg2 : i32, i32
  }
  func.func @transform_1(%arg0: i32, %arg1: i32, %arg2: i32) -> (i32, i32) {
    %c0_i32 = arith.constant 0 : i32
    return %arg1, %arg2 : i32, i32
  }
  func.func @transform_2(%arg0: i32, %arg1: i32, %arg2: i32) -> (i32, i32) {
    %c0_i32 = arith.constant 0 : i32
    %c0_i32_0 = arith.constant 0 : i32
    return %c0_i32, %arg2 : i32, i32
  }
  func.func @transform_3(%arg0: i32, %arg1: i32, %arg2: i32) -> (i32, i32) {
    %c0_i32 = arith.constant 0 : i32
    %c0_i32_0 = arith.constant 0 : i32
    return %arg0, %c0_i32 : i32, i32
  }
  func.func @transform_4(%arg0: i32, %arg1: i32, %arg2: i32) -> (i32, i32) {
    %c0_i32 = arith.constant 0 : i32
    %c0_i32_0 = arith.constant 0 : i32
    return %c0_i32, %arg1 : i32, i32
  }
  func.func @transform_5(%arg0: i32, %arg1: i32, %arg2: i32) -> (i32, i32) {
    %c0_i32 = arith.constant 0 : i32
    return %arg0, %arg1 : i32, i32
  }
}

</mosaic_0001>

<llo_original>
// kernel: tpu_custom_call.1
$region0: #{tpu_custom_call.1}
  #allocation0 [shape = 'u32[]', space=smem, size = 0x4, offset = 0x4, fixed_abs, tag = 'smem constant byte address 0x4 - core index']
  #allocation1 [shape = 'u32[72,128]{1,0:T(1,128)}', space=vmem, size = 0x9000, scoped, tag = 'internal scratch']
  #allocation2 [shape = 'f32[40,128]{1,0:T(8,128)}', space=vmem, size = 0x5000, scoped, tag = 'scratch operand']
  %s0 = inlined_call_operand.vmem [shape: bf16[40,56], index: 0, kind: input, shape index: {}]
  %s1 = inlined_call_operand.vmem [shape: bf16[128,56], index: 1, kind: input, shape index: {}]
  %s2 = inlined_call_operand.vmem [shape: bf16[1,56], index: 2, kind: input, shape index: {}]
  %s3 = inlined_call_operand.vmem [shape: f32[40,1], index: 3, kind: input, shape index: {}]
  %s4 = inlined_call_operand.vmem [shape: f32[1,128], index: 4, kind: input, shape index: {}]
  %s5 = inlined_call_operand.hbm [shape: f32[40,128], index: 5, kind: output, shape index: {}]
  %s6 = sld [smem:[#allocation0]]
  $region38: #{tpu_custom_call.1} parent=0
    _
  %s8 = ssub.s32 1, %s6
  %s9 = scalar_select 0, %s8, %s6
  $region1: #{tpu_custom_call.1} parent=0
    #allocation3 [shape = 'u8[20480]{0}', space=vmem, size = 0x5000, scoped, tag = 'output window, operand 0, single buffered']
    #allocation4 [shape = 's32[1]{0}', space=sflag, size = 0x4, scoped, tag = 'scoped memory for tpu_custom_call.1']
    %10 = vsyncpa [#allocation4], 0
    // Predicated region
    $region2: #{tpu_custom_call.1} parent=1 // pred_check
      _
    $region3: #{tpu_custom_call.1} parent=1 // pred_check_branch
      %12 = sbr.rel (0) target = $region5
    $region4: #{tpu_custom_call.1} parent=1 // pred_region
      _
    $region5: #{tpu_custom_call.1} parent=1 // pred_fallthru
      _
    // Predicated region
    $region6: #{tpu_custom_call.1} parent=1 // pred_check
      _
    $region7: #{tpu_custom_call.1} parent=1 // pred_check_branch
      %14 = sbr.rel (0) target = $region9
    $region8: #{tpu_custom_call.1} parent=1 // pred_region
      _
    $region9: #{tpu_custom_call.1} parent=1 // pred_fallthru
      _
    // Predicated region
    $region10: #{tpu_custom_call.1} parent=1 // pred_check
      _
    $region11: #{tpu_custom_call.1} parent=1 // pred_check_branch
      %16 = sbr.rel (0) target = $region13
    $region12: #{tpu_custom_call.1} parent=1 // pred_region
      _
    $region13: #{tpu_custom_call.1} parent=1 // pred_fallthru
      _
    // Predicated region
    $region14: #{tpu_custom_call.1} parent=1 // pred_check
      _
    $region15: #{tpu_custom_call.1} parent=1 // pred_check_branch
      %18 = sbr.rel (0) target = $region17
    $region16: #{tpu_custom_call.1} parent=1 // pred_region
      _
    $region17: #{tpu_custom_call.1} parent=1 // pred_fallthru
      _
    // Predicated region
    $region18: #{tpu_custom_call.1} parent=1 // pred_check
      _
    $region19: #{tpu_custom_call.1} parent=1 // pred_check_branch
      %20 = sbr.rel (0) target = $region21
    $region20: #{tpu_custom_call.1} parent=1 // pred_region
      _
    $region21: #{tpu_custom_call.1} parent=1 // pred_fallthru
      _
    %p21 = scmp.eq.s32.totalorder 0, 0
    // Predicated region
    $region22: #{tpu_custom_call.1} parent=1 // pred_check
      %p22 = pneg %p21
    $region23: #{tpu_custom_call.1} parent=1 // pred_check_branch
      %24 = sbr.rel (%p22) target = $region25
    $region24: #{tpu_custom_call.1} parent=1 // pred_region
      %25 = vst [vmem:[#allocation2] sm:$0xff] 0.0
      %26 = vst [vmem:[#allocation2 + $0x8] sm:$0xff] 0.0
      %27 = vst [vmem:[#allocation2 + $0x10] sm:$0xff] 0.0
      %28 = vst [vmem:[#allocation2 + $0x18] sm:$0xff] 0.0
      %29 = vst [vmem:[#allocation2 + $0x20] sm:$0xff] 0.0
    $region25: #{tpu_custom_call.1} parent=1 // pred_fallthru
      _
    %v30 = vld [vmem:[%s0] sm:$0xf]
    %v31 = vld [vmem:[%s0 + $0x4] sm:$0xf]
    %v32 = vld [vmem:[%s0 + $0x8] sm:$0xf]
    %v33 = vld [vmem:[%s0 + $0xc] sm:$0xf]
    %v34 = vld [vmem:[%s0 + $0x10] sm:$0xf]
    %v35 = vld [vmem:[%s2] sm:$0x1]
    %v37 = vpack.i.b16 %v35, %v35
    %v39 = vperm.slane %v37, 0
    %v40 = vunpack.c.l.bf16 %v30
    %v41 = vunpack.c.l.bf16 %v31
    %v42 = vunpack.c.l.bf16 %v32
    %v43 = vunpack.c.l.bf16 %v33
    %v44 = vunpack.c.l.bf16 %v34
    %v45 = vunpack.c.l.bf16 %v39
    %v46 = vmul.f32 %v40, %v45
    %v47 = vmul.f32 %v41, %v45
    %v48 = vmul.f32 %v42, %v45
    %v49 = vmul.f32 %v43, %v45
    %v50 = vmul.f32 %v44, %v45
    %v51 = vpack.c.bf16 %v47, %v46
    %v52 = vpack.c.bf16 %v49, %v48
    %v53 = vpack.c.bf16 %v50, %v50
    %v54 = vld [vmem:[#allocation2] sm:$0xff]
    %v55 = vld [vmem:[#allocation2 + $0x8] sm:$0xff]
    %v56 = vld [vmem:[#allocation2 + $0x10] sm:$0xff]
    %v57 = vld [vmem:[#allocation2 + $0x18] sm:$0xff]
    %v58 = vld [vmem:[#allocation2 + $0x20] sm:$0xff]
    %v59 = vld [vmem:[%s1] sm:$0xf]
    %v60 = vld [vmem:[%s1 + $0x4] sm:$0xf]
    %v61 = vld [vmem:[%s1 + $0x8] sm:$0xf]
    %v62 = vld [vmem:[%s1 + $0xc] sm:$0xf]
    %v63 = vld [vmem:[%s1 + $0x10] sm:$0xf]
    %v64 = vld [vmem:[%s1 + $0x14] sm:$0xf]
    %v65 = vld [vmem:[%s1 + $0x18] sm:$0xf]
    %v66 = vld [vmem:[%s1 + $0x1c] sm:$0xf]
    %v67 = vld [vmem:[%s1 + $0x20] sm:$0xf]
    %v68 = vld [vmem:[%s1 + $0x24] sm:$0xf]
    %v69 = vld [vmem:[%s1 + $0x28] sm:$0xf]
    %v70 = vld [vmem:[%s1 + $0x2c] sm:$0xf]
    %v71 = vld [vmem:[%s1 + $0x30] sm:$0xf]
    %v72 = vld [vmem:[%s1 + $0x34] sm:$0xf]
    %v73 = vld [vmem:[%s1 + $0x38] sm:$0xf]
    %v74 = vld [vmem:[%s1 + $0x3c] sm:$0xf]
    %v91 = vunpack.c.l.b16 %v59
    %v92 = vunpack.c.l.b16 %v60
    %v93 = vunpack.c.l.b16 %v61
    %v94 = vunpack.c.l.b16 %v62
    %v95 = vunpack.c.l.b16 %v63
    %v96 = vunpack.c.l.b16 %v64
    %v97 = vunpack.c.l.b16 %v65
    %v98 = vunpack.c.l.b16 %v66
    %v99 = vunpack.c.l.b16 %v67
    %v100 = vunpack.c.l.b16 %v68
    %v101 = vunpack.c.l.b16 %v69
    %v102 = vunpack.c.l.b16 %v70
    %v103 = vunpack.c.l.b16 %v71
    %v104 = vunpack.c.l.b16 %v72
    %v105 = vunpack.c.l.b16 %v73
    %v106 = vunpack.c.l.b16 %v74
    %v107 = vpack.c.b16 %v92, %v91
    %v108 = vpack.c.b16 %v94, %v93
    %v109 = vpack.c.b16 %v96, %v95
    %v110 = vpack.c.b16 %v98, %v97
    %v111 = vpack.c.b16 %v100, %v99
    %v112 = vpack.c.b16 %v102, %v101
    %v113 = vpack.c.b16 %v104, %v103
    %v114 = vpack.c.b16 %v106, %v105
    %vm115 = vcmask 457728
    %v117 = vsel %vm115, %v51, 0
    %v120 = vsel %vm115, %v52, 0
    %v123 = vsel %vm115, %v53, 0
    %v126 = vsel %vm115, %v107, 0
    %v129 = vsel %vm115, %v108, 0
    %v132 = vsel %vm115, %v109, 0
    %v135 = vsel %vm115, %v110, 0
    %v138 = vsel %vm115, %v111, 0
    %v141 = vsel %vm115, %v112, 0
    %v144 = vsel %vm115, %v113, 0
    %v147 = vsel %vm115, %v114, 0
    %149 = vmatpush.bf16.xpose.msra.mxu0 %v147
    %150 = vmatpush.bf16.xpose.msra.mxu0 %v144
    %151 = vmatpush.bf16.xpose.msra.mxu0 %v141
    %152 = vmatpush.bf16.xpose.msra.mxu0 %v138
    %153 = vmatpush.bf16.xpose.msra.mxu0 %v135
    %154 = vmatpush.bf16.xpose.msra.mxu0 %v132
    %155 = vmatpush.bf16.xpose.msra.mxu0 %v129
    %156 = vmatpush.bf16.xpose.msra.mxu0 %v126
    %157 = vmatmul.bf16.gmra.mxu0 %v117
    %v158 = vpop.f32.mrf.mxu0
    %v159 = vadd.f32 0.0, %v158
    %v160 = vpop.f32.mrf.mxu0
    %v161 = vadd.f32 0.0, %v160
    %162 = vmatmul.bf16.gmra.mxu0 %v120
    %v163 = vpop.f32.mrf.mxu0
    %v164 = vadd.f32 0.0, %v163
    %v165 = vpop.f32.mrf.mxu0
    %v166 = vadd.f32 0.0, %v165
    %167 = vmatmul.bf16.gmra.mxu0 %v123
    %v168 = vpop.f32.mrf.mxu0
    %v169 = vadd.f32 0.0, %v168
    %v170 = vpop.f32.mrf.mxu0
    %171 = vdwg.mxu0
    %v172 = vadd.f32 %v54, %v159
    %v173 = vadd.f32 %v55, %v161
    %v174 = vadd.f32 %v56, %v164
    %v175 = vadd.f32 %v57, %v166
    %v176 = vadd.f32 %v58, %v169
    %177 = vst [vmem:[#allocation2] sm:$0xff] %v172
    %178 = vst [vmem:[#allocation2 + $0x8] sm:$0xff] %v173
    %179 = vst [vmem:[#allocation2 + $0x10] sm:$0xff] %v174
    %180 = vst [vmem:[#allocation2 + $0x18] sm:$0xff] %v175
    %181 = vst [vmem:[#allocation2 + $0x20] sm:$0xff] %v176
    // Predicated region
    $region26: #{tpu_custom_call.1} parent=1 // pred_check
      %p182 = pneg %p21
    $region27: #{tpu_custom_call.1} parent=1 // pred_check_branch
      %184 = sbr.rel (%p182) target = $region29
    $region28: #{tpu_custom_call.1} parent=1 // pred_region
      %v185 = vld [vmem:[#allocation2] sm:$0xff]
      %v186 = vld [vmem:[#allocation2 + $0x8] sm:$0xff]
      %v187 = vld [vmem:[#allocation2 + $0x10] sm:$0xff]
      %v188 = vld [vmem:[#allocation2 + $0x18] sm:$0xff]
      %v189 = vld [vmem:[#allocation2 + $0x20] sm:$0xff]
      %v190 = vld [vmem:[%s3] sm:$0xff]
      %v191 = vld [vmem:[%s3 + $0x8] sm:$0xff]
      %v192 = vld [vmem:[%s3 + $0x10] sm:$0xff]
      %v193 = vld [vmem:[%s3 + $0x18] sm:$0xff]
      %v194 = vld [vmem:[%s3 + $0x20] sm:$0xff]
      %196 = vset.pattern.permute.xlu0 0
      %197 = vperm.xlu0 %196, %v190
      %v198 = vpop.permute.xlu0 %197
      %201 = vset.pattern.permute.xlu0 0
      %202 = vperm.xlu0 %201, %v191
      %v203 = vpop.permute.xlu0 %202
      %206 = vset.pattern.permute.xlu0 0
      %207 = vperm.xlu0 %206, %v192
      %v208 = vpop.permute.xlu0 %207
      %211 = vset.pattern.permute.xlu0 0
      %212 = vperm.xlu0 %211, %v193
      %v213 = vpop.permute.xlu0 %212
      %216 = vset.pattern.permute.xlu0 0
      %217 = vperm.xlu0 %216, %v194
      %v218 = vpop.permute.xlu0 %217
      %v220 = vmul.f32 %v185, %v198
      %v221 = vmul.f32 %v186, %v203
      %v222 = vmul.f32 %v187, %v208
      %v223 = vmul.f32 %v188, %v213
      %v224 = vmul.f32 %v189, %v218
      %v225 = vld [vmem:[%s4] sm:$0x1]
      %v227 = vperm.slane %v225, 0
      %v229 = vmul.f32 %v220, %v227
      %v230 = vmul.f32 %v221, %v227
      %v231 = vmul.f32 %v222, %v227
      %v232 = vmul.f32 %v223, %v227
      %v233 = vmul.f32 %v224, %v227
      %234 = vst [vmem:[#allocation3] sm:$0xff] %v229
      %235 = vst [vmem:[#allocation3 + $0x8] sm:$0xff] %v230
      %236 = vst [vmem:[#allocation3 + $0x10] sm:$0xff] %v231
      %237 = vst [vmem:[#allocation3 + $0x18] sm:$0xff] %v232
      %238 = vst [vmem:[#allocation3 + $0x20] sm:$0xff] %v233
    $region29: #{tpu_custom_call.1} parent=1 // pred_fallthru
      _
    // Predicated region
    $region30: #{tpu_custom_call.1} parent=1 // pred_check
      _
    $region31: #{tpu_custom_call.1} parent=1 // pred_check_branch
      %240 = sbr.rel (0) target = $region33
    $region32: #{tpu_custom_call.1} parent=1 // pred_region
      %242 = vsyncadd [#allocation4], 0
      %s243 = sshll.u32 [#allocation3], 4
      %s244 = int_to_ptr.vmem [resolvable:$true] %s243
      %s245 = sshll.u32 %s5, 4
      %s246 = int_to_ptr.hbm [resolvable:$true] %s245
      %251 = dma.vmem_to_hbm [thread:$0]  %s244, 640, %s246, [#allocation4], 128, 128, 8
    $region33: #{tpu_custom_call.1} parent=1 // pred_fallthru
      _
    // Predicated region
    $region34: #{tpu_custom_call.1} parent=1 // pred_check
      _
    $region35: #{tpu_custom_call.1} parent=1 // pred_check_branch
      %253 = sbr.rel (0) target = $region37
    $region36: #{tpu_custom_call.1} parent=1 // pred_region
      %255 = dma.done [#allocation4], 640
    $region37: #{tpu_custom_call.1} parent=1 // pred_fallthru
      _
    %256 = vsyncpa [#allocation4], 1

</llo_original>
